<compile_context>
chip_gen: v7x
topology: tpu7x:2x2x1
jax: 0.10.0
libtpu: 0.0.40
codegen_flags: <defaults>
</compile_context>

<pallas_src>
import functools

import jax
import jax.numpy as jnp
from jax.experimental import pallas as pl
from jax.experimental.pallas import tpu as pltpu

N_OBSERVATIONS = 2   # qubitmanip.py: n_observations = 2
N_ACTIONS = 4        # QubitEnv.n_actions = 4
HIDDEN = 16
LANES = 128          # one full vreg row (lane axis)
SLAB_ROWS = 40       # packed-parameter slab rows (8-sublane aligned regions)

# Packed slab layout (f32, shape (SLAB_ROWS, LANES)), unset entries are zero:
#   rows 0..1   : w1  [2, 16]
#   row  2      : b1  [16]
#   row  3      : b2  [16]
#   row  4      : b3  [4]
#   rows 5..7   : zero padding (keeps w2 / w3 8-row aligned)
#   rows 8..23  : w2  [16, 16]
#   rows 24..39 : w3  [16, 4]
_W2_ROW = 8
_W3_ROW = 24


def _dqn_kernel(x_ref, p_ref, out_ref):
    """Fused 3-layer MLP; all three contractions run on the VPU (no MXU)."""
    x = x_ref[...].astype(jnp.float32)              # [bt, 2]

    w1r0 = p_ref[0:1, :]                            # [1, 128]
    w1r1 = p_ref[1:2, :]
    b1 = p_ref[2:3, :]
    b2 = p_ref[3:4, :]
    b3 = p_ref[4:5, :]
    w2 = p_ref[_W2_ROW:_W2_ROW + HIDDEN, :]         # [16, 128]
    w3 = p_ref[_W3_ROW:_W3_ROW + HIDDEN, :]         # [16, 128]

    # layer 1 (K=2): two broadcast-MACs on the VPU.
    h1 = x[:, 0:1] * w1r0 + x[:, 1:2] * w1r1 + b1
    h1 = jnp.maximum(h1, 0.0)                       # [bt, 128]; lanes >=16 are 0

    # layer 2 (16 x 16): statically unrolled broadcast-MACs over k.
    acc = b2 + h1[:, 0:1] * w2[0:1, :]
    for k in range(1, HIDDEN):
        acc = acc + h1[:, k:k + 1] * w2[k:k + 1, :]
    h2 = jnp.maximum(acc, 0.0)                      # [bt, 128]

    # layer 3 (16 x 4): same pattern; lanes >= N_ACTIONS stay exactly 0.
    out = b3 + h2[:, 0:1] * w3[0:1, :]
    for k in range(1, HIDDEN):
        out = out + h2[:, k:k + 1] * w3[k:k + 1, :]

    out_ref[...] = out.astype(out_ref.dtype)        # lane-dense [bt, 128] store


def _round_up(n, m):
    return ((n + m - 1) // m) * m


@functools.partial(jax.jit, static_argnames=("block_b",))
def dqn_forward(x, param_slab, *, block_b=256):
    """x: [B, n_observations] float32 -> [B, n_actions] float32."""
    B = x.shape[0]
    bt = min(block_b, _round_up(B, 8))     # batch tile (multiple of 8 sublanes)
    Bp = _round_up(B, bt)                  # padded batch
    if Bp != B:
        x = jnp.pad(x, ((0, Bp - B), (0, 0)))

    out = pl.pallas_call(
        _dqn_kernel,
        out_shape=jax.ShapeDtypeStruct((Bp, LANES), jnp.float32),
        grid=(Bp // bt,),
        in_specs=[
            pl.BlockSpec((bt, N_OBSERVATIONS), lambda i: (i, 0)),
            # parameter slab: one block, stays resident across all grid steps
            pl.BlockSpec((SLAB_ROWS, LANES), lambda i: (0, 0)),
        ],
        out_specs=pl.BlockSpec((bt, LANES), lambda i: (i, 0)),
        compiler_params=pltpu.CompilerParams(
            dimension_semantics=("parallel",)),   # shard batch across v7x TCs
    )(x, param_slab)

    return out[:B, :N_ACTIONS]


def init_dqn_params(key):
    """PyTorch nn.Linear default init: U(-1/sqrt(fan_in), +1/sqrt(fan_in)).
    Weights are stored [in_features, out_features] for the kernel layout."""
    def linear(key, fan_in, fan_out):
        kw, kb = jax.random.split(key)
        bound = 1.0 / jnp.sqrt(fan_in)
        w = jax.random.uniform(kw, (fan_in, fan_out), jnp.float32, -bound, bound)
        b = jax.random.uniform(kb, (fan_out,), jnp.float32, -bound, bound)
        return w, b

    k1, k2, k3 = jax.random.split(key, 3)
    w1, b1 = linear(k1, N_OBSERVATIONS, HIDDEN)
    w2, b2 = linear(k2, HIDDEN, HIDDEN)
    w3, b3 = linear(k3, HIDDEN, N_ACTIONS)
    return (w1, b1, w2, b2, w3, b3)


def pack_params(params):
    """Pack all weights + biases into one lane-padded (40, 128) f32 slab."""
    w1, b1, w2, b2, w3, b3 = params
    slab = jnp.zeros((SLAB_ROWS, LANES), jnp.float32)
    slab = slab.at[0:2, :HIDDEN].set(w1)
    slab = slab.at[2, :HIDDEN].set(b1)
    slab = slab.at[3, :HIDDEN].set(b2)
    slab = slab.at[4, :N_ACTIONS].set(b3)
    slab = slab.at[_W2_ROW:_W2_ROW + HIDDEN, :HIDDEN].set(w2)
    slab = slab.at[_W3_ROW:_W3_ROW + HIDDEN, :N_ACTIONS].set(w3)
    return slab


def dqn_reference(x, params):
    """Pure-JAX reference for correctness checking."""
    w1, b1, w2, b2, w3, b3 = params
    h1 = jnp.maximum(x @ w1 + b1, 0.0)
    h2 = jnp.maximum(h1 @ w2 + b2, 0.0)
    return h2 @ w3 + b3


if __name__ == "__main__":
    key = jax.random.PRNGKey(0)
    k_params, k_x = jax.random.split(key)

    params = init_dqn_params(k_params)
    slab = pack_params(params)

    # RL states are (theta, phi) pairs -> batch of 8 observations, shape [8, 2]
    batch = 8
    x = jax.random.uniform(
        k_x, (batch, N_OBSERVATIONS), jnp.float32, 0.0, 2.0 * jnp.pi
    )

    out = dqn_forward(x, slab)
    jax.block_until_ready(out)

    ref = dqn_reference(x, params)
    assert out.shape == (batch, N_ACTIONS)
    assert jnp.allclose(out, ref, atol=1e-4, rtol=1e-5), "mismatch vs JAX reference"

    # TODO(synk): optionally fuse greedy-action argmax into the kernel so the
    # lane-sparse Q-value slab never leaves VMEM in the RL acting loop.
    print("KERNEL_OK")
</pallas_src>

<mosaic_0001>
module attributes {stable_mosaic.version = 11 : i64} {
  func.func @_dqn_kernel(%arg0: i32, %arg1: memref<8x2xf32, #tpu.memory_space<vmem>>, %arg2: memref<40x128xf32, #tpu.memory_space<vmem>>, %arg3: memref<8x128xf32, #tpu.memory_space<vmem>>) attributes {dimension_semantics = [#tpu.dimension_semantics<parallel>], iteration_bounds = array<i64: 1>, scalar_prefetch = 0 : i64, scratch_operands = 0 : i64, tpu.core_type = #tpu.core_type<tc>, window_params = [{transform_indices = @transform_0, window_bounds = array<i64: 8, 2>}, {pipeline_mode = #tpu.pipeline_mode<synchronous>, transform_indices = @transform_1, window_bounds = array<i64: 40, 128>}, {transform_indices = @transform_2, window_bounds = array<i64: 8, 128>}]} {
    %c0 = arith.constant 0 : index
    %c0_0 = arith.constant 0 : index
    %0 = vector.load %arg1[%c0, %c0_0] : memref<8x2xf32, #tpu.memory_space<vmem>>, vector<8x2xf32>
    %c0_1 = arith.constant 0 : index
    %c0_2 = arith.constant 0 : index
    %1 = vector.load %arg2[%c0_1, %c0_2] : memref<40x128xf32, #tpu.memory_space<vmem>>, vector<1x128xf32>
    %c1 = arith.constant 1 : index
    %c0_3 = arith.constant 0 : index
    %2 = vector.load %arg2[%c1, %c0_3] : memref<40x128xf32, #tpu.memory_space<vmem>>, vector<1x128xf32>
    %c2 = arith.constant 2 : index
    %c0_4 = arith.constant 0 : index
    %3 = vector.load %arg2[%c2, %c0_4] : memref<40x128xf32, #tpu.memory_space<vmem>>, vector<1x128xf32>
    %c3 = arith.constant 3 : index
    %c0_5 = arith.constant 0 : index
    %4 = vector.load %arg2[%c3, %c0_5] : memref<40x128xf32, #tpu.memory_space<vmem>>, vector<1x128xf32>
    %c4 = arith.constant 4 : index
    %c0_6 = arith.constant 0 : index
    %5 = vector.load %arg2[%c4, %c0_6] : memref<40x128xf32, #tpu.memory_space<vmem>>, vector<1x128xf32>
    %c8 = arith.constant 8 : index
    %c0_7 = arith.constant 0 : index
    %6 = vector.load %arg2[%c8, %c0_7] : memref<40x128xf32, #tpu.memory_space<vmem>>, vector<16x128xf32>
    %c24 = arith.constant 24 : index
    %c0_8 = arith.constant 0 : index
    %7 = vector.load %arg2[%c24, %c0_8] : memref<40x128xf32, #tpu.memory_space<vmem>>, vector<16x128xf32>
    %8 = vector.extract_strided_slice %0 {offsets = [0, 0], sizes = [8, 1], strides = [1, 1]} : vector<8x2xf32> to vector<8x1xf32>
    %9 = vector.broadcast %8 : vector<8x1xf32> to vector<8x128xf32>
    %10 = vector.broadcast %1 : vector<1x128xf32> to vector<8x128xf32>
    %11 = arith.mulf %9, %10 : vector<8x128xf32>
    %12 = vector.extract_strided_slice %0 {offsets = [0, 1], sizes = [8, 1], strides = [1, 1]} : vector<8x2xf32> to vector<8x1xf32>
    %13 = vector.broadcast %12 : vector<8x1xf32> to vector<8x128xf32>
    %14 = vector.broadcast %2 : vector<1x128xf32> to vector<8x128xf32>
    %15 = arith.mulf %13, %14 : vector<8x128xf32>
    %16 = arith.addf %11, %15 : vector<8x128xf32>
    %17 = vector.broadcast %3 : vector<1x128xf32> to vector<8x128xf32>
    %18 = arith.addf %16, %17 : vector<8x128xf32>
    %cst = arith.constant 0.000000e+00 : f32
    %19 = vector.broadcast %cst : f32 to vector<8x128xf32>
    %20 = arith.maximumf %18, %19 : vector<8x128xf32>
    %21 = vector.extract_strided_slice %20 {offsets = [0, 0], sizes = [8, 1], strides = [1, 1]} : vector<8x128xf32> to vector<8x1xf32>
    %22 = vector.extract_strided_slice %6 {offsets = [0, 0], sizes = [1, 128], strides = [1, 1]} : vector<16x128xf32> to vector<1x128xf32>
    %23 = vector.broadcast %21 : vector<8x1xf32> to vector<8x128xf32>
    %24 = vector.broadcast %22 : vector<1x128xf32> to vector<8x128xf32>
    %25 = arith.mulf %23, %24 : vector<8x128xf32>
    %26 = vector.broadcast %4 : vector<1x128xf32> to vector<8x128xf32>
    %27 = arith.addf %26, %25 : vector<8x128xf32>
    %28 = vector.extract_strided_slice %20 {offsets = [0, 1], sizes = [8, 1], strides = [1, 1]} : vector<8x128xf32> to vector<8x1xf32>
    %29 = vector.extract_strided_slice %6 {offsets = [1, 0], sizes = [1, 128], strides = [1, 1]} : vector<16x128xf32> to vector<1x128xf32>
    %30 = vector.broadcast %28 : vector<8x1xf32> to vector<8x128xf32>
    %31 = vector.broadcast %29 : vector<1x128xf32> to vector<8x128xf32>
    %32 = arith.mulf %30, %31 : vector<8x128xf32>
    %33 = arith.addf %27, %32 : vector<8x128xf32>
    %34 = vector.extract_strided_slice %20 {offsets = [0, 2], sizes = [8, 1], strides = [1, 1]} : vector<8x128xf32> to vector<8x1xf32>
    %35 = vector.extract_strided_slice %6 {offsets = [2, 0], sizes = [1, 128], strides = [1, 1]} : vector<16x128xf32> to vector<1x128xf32>
    %36 = vector.broadcast %34 : vector<8x1xf32> to vector<8x128xf32>
    %37 = vector.broadcast %35 : vector<1x128xf32> to vector<8x128xf32>
    %38 = arith.mulf %36, %37 : vector<8x128xf32>
    %39 = arith.addf %33, %38 : vector<8x128xf32>
    %40 = vector.extract_strided_slice %20 {offsets = [0, 3], sizes = [8, 1], strides = [1, 1]} : vector<8x128xf32> to vector<8x1xf32>
    %41 = vector.extract_strided_slice %6 {offsets = [3, 0], sizes = [1, 128], strides = [1, 1]} : vector<16x128xf32> to vector<1x128xf32>
    %42 = vector.broadcast %40 : vector<8x1xf32> to vector<8x128xf32>
    %43 = vector.broadcast %41 : vector<1x128xf32> to vector<8x128xf32>
    %44 = arith.mulf %42, %43 : vector<8x128xf32>
    %45 = arith.addf %39, %44 : vector<8x128xf32>
    %46 = vector.extract_strided_slice %20 {offsets = [0, 4], sizes = [8, 1], strides = [1, 1]} : vector<8x128xf32> to vector<8x1xf32>
    %47 = vector.extract_strided_slice %6 {offsets = [4, 0], sizes = [1, 128], strides = [1, 1]} : vector<16x128xf32> to vector<1x128xf32>
    %48 = vector.broadcast %46 : vector<8x1xf32> to vector<8x128xf32>
    %49 = vector.broadcast %47 : vector<1x128xf32> to vector<8x128xf32>
    %50 = arith.mulf %48, %49 : vector<8x128xf32>
    %51 = arith.addf %45, %50 : vector<8x128xf32>
    %52 = vector.extract_strided_slice %20 {offsets = [0, 5], sizes = [8, 1], strides = [1, 1]} : vector<8x128xf32> to vector<8x1xf32>
    %53 = vector.extract_strided_slice %6 {offsets = [5, 0], sizes = [1, 128], strides = [1, 1]} : vector<16x128xf32> to vector<1x128xf32>
    %54 = vector.broadcast %52 : vector<8x1xf32> to vector<8x128xf32>
    %55 = vector.broadcast %53 : vector<1x128xf32> to vector<8x128xf32>
    %56 = arith.mulf %54, %55 : vector<8x128xf32>
    %57 = arith.addf %51, %56 : vector<8x128xf32>
    %58 = vector.extract_strided_slice %20 {offsets = [0, 6], sizes = [8, 1], strides = [1, 1]} : vector<8x128xf32> to vector<8x1xf32>
    %59 = vector.extract_strided_slice %6 {offsets = [6, 0], sizes = [1, 128], strides = [1, 1]} : vector<16x128xf32> to vector<1x128xf32>
    %60 = vector.broadcast %58 : vector<8x1xf32> to vector<8x128xf32>
    %61 = vector.broadcast %59 : vector<1x128xf32> to vector<8x128xf32>
    %62 = arith.mulf %60, %61 : vector<8x128xf32>
    %63 = arith.addf %57, %62 : vector<8x128xf32>
    %64 = vector.extract_strided_slice %20 {offsets = [0, 7], sizes = [8, 1], strides = [1, 1]} : vector<8x128xf32> to vector<8x1xf32>
    %65 = vector.extract_strided_slice %6 {offsets = [7, 0], sizes = [1, 128], strides = [1, 1]} : vector<16x128xf32> to vector<1x128xf32>
    %66 = vector.broadcast %64 : vector<8x1xf32> to vector<8x128xf32>
    %67 = vector.broadcast %65 : vector<1x128xf32> to vector<8x128xf32>
    %68 = arith.mulf %66, %67 : vector<8x128xf32>
    %69 = arith.addf %63, %68 : vector<8x128xf32>
    %70 = vector.extract_strided_slice %20 {offsets = [0, 8], sizes = [8, 1], strides = [1, 1]} : vector<8x128xf32> to vector<8x1xf32>
    %71 = vector.extract_strided_slice %6 {offsets = [8, 0], sizes = [1, 128], strides = [1, 1]} : vector<16x128xf32> to vector<1x128xf32>
    %72 = vector.broadcast %70 : vector<8x1xf32> to vector<8x128xf32>
    %73 = vector.broadcast %71 : vector<1x128xf32> to vector<8x128xf32>
    %74 = arith.mulf %72, %73 : vector<8x128xf32>
    %75 = arith.addf %69, %74 : vector<8x128xf32>
    %76 = vector.extract_strided_slice %20 {offsets = [0, 9], sizes = [8, 1], strides = [1, 1]} : vector<8x128xf32> to vector<8x1xf32>
    %77 = vector.extract_strided_slice %6 {offsets = [9, 0], sizes = [1, 128], strides = [1, 1]} : vector<16x128xf32> to vector<1x128xf32>
    %78 = vector.broadcast %76 : vector<8x1xf32> to vector<8x128xf32>
    %79 = vector.broadcast %77 : vector<1x128xf32> to vector<8x128xf32>
    %80 = arith.mulf %78, %79 : vector<8x128xf32>
    %81 = arith.addf %75, %80 : vector<8x128xf32>
    %82 = vector.extract_strided_slice %20 {offsets = [0, 10], sizes = [8, 1], strides = [1, 1]} : vector<8x128xf32> to vector<8x1xf32>
    %83 = vector.extract_strided_slice %6 {offsets = [10, 0], sizes = [1, 128], strides = [1, 1]} : vector<16x128xf32> to vector<1x128xf32>
    %84 = vector.broadcast %82 : vector<8x1xf32> to vector<8x128xf32>
    %85 = vector.broadcast %83 : vector<1x128xf32> to vector<8x128xf32>
    %86 = arith.mulf %84, %85 : vector<8x128xf32>
    %87 = arith.addf %81, %86 : vector<8x128xf32>
    %88 = vector.extract_strided_slice %20 {offsets = [0, 11], sizes = [8, 1], strides = [1, 1]} : vector<8x128xf32> to vector<8x1xf32>
    %89 = vector.extract_strided_slice %6 {offsets = [11, 0], sizes = [1, 128], strides = [1, 1]} : vector<16x128xf32> to vector<1x128xf32>
    %90 = vector.broadcast %88 : vector<8x1xf32> to vector<8x128xf32>
    %91 = vector.broadcast %89 : vector<1x128xf32> to vector<8x128xf32>
    %92 = arith.mulf %90, %91 : vector<8x128xf32>
    %93 = arith.addf %87, %92 : vector<8x128xf32>
    %94 = vector.extract_strided_slice %20 {offsets = [0, 12], sizes = [8, 1], strides = [1, 1]} : vector<8x128xf32> to vector<8x1xf32>
    %95 = vector.extract_strided_slice %6 {offsets = [12, 0], sizes = [1, 128], strides = [1, 1]} : vector<16x128xf32> to vector<1x128xf32>
    %96 = vector.broadcast %94 : vector<8x1xf32> to vector<8x128xf32>
    %97 = vector.broadcast %95 : vector<1x128xf32> to vector<8x128xf32>
    %98 = arith.mulf %96, %97 : vector<8x128xf32>
    %99 = arith.addf %93, %98 : vector<8x128xf32>
    %100 = vector.extract_strided_slice %20 {offsets = [0, 13], sizes = [8, 1], strides = [1, 1]} : vector<8x128xf32> to vector<8x1xf32>
    %101 = vector.extract_strided_slice %6 {offsets = [13, 0], sizes = [1, 128], strides = [1, 1]} : vector<16x128xf32> to vector<1x128xf32>
    %102 = vector.broadcast %100 : vector<8x1xf32> to vector<8x128xf32>
    %103 = vector.broadcast %101 : vector<1x128xf32> to vector<8x128xf32>
    %104 = arith.mulf %102, %103 : vector<8x128xf32>
    %105 = arith.addf %99, %104 : vector<8x128xf32>
    %106 = vector.extract_strided_slice %20 {offsets = [0, 14], sizes = [8, 1], strides = [1, 1]} : vector<8x128xf32> to vector<8x1xf32>
    %107 = vector.extract_strided_slice %6 {offsets = [14, 0], sizes = [1, 128], strides = [1, 1]} : vector<16x128xf32> to vector<1x128xf32>
    %108 = vector.broadcast %106 : vector<8x1xf32> to vector<8x128xf32>
    %109 = vector.broadcast %107 : vector<1x128xf32> to vector<8x128xf32>
    %110 = arith.mulf %108, %109 : vector<8x128xf32>
    %111 = arith.addf %105, %110 : vector<8x128xf32>
    %112 = vector.extract_strided_slice %20 {offsets = [0, 15], sizes = [8, 1], strides = [1, 1]} : vector<8x128xf32> to vector<8x1xf32>
    %113 = vector.extract_strided_slice %6 {offsets = [15, 0], sizes = [1, 128], strides = [1, 1]} : vector<16x128xf32> to vector<1x128xf32>
    %114 = vector.broadcast %112 : vector<8x1xf32> to vector<8x128xf32>
    %115 = vector.broadcast %113 : vector<1x128xf32> to vector<8x128xf32>
    %116 = arith.mulf %114, %115 : vector<8x128xf32>
    %117 = arith.addf %111, %116 : vector<8x128xf32>
    %cst_9 = arith.constant 0.000000e+00 : f32
    %118 = vector.broadcast %cst_9 : f32 to vector<8x128xf32>
    %119 = arith.maximumf %117, %118 : vector<8x128xf32>
    %120 = vector.extract_strided_slice %119 {offsets = [0, 0], sizes = [8, 1], strides = [1, 1]} : vector<8x128xf32> to vector<8x1xf32>
    %121 = vector.extract_strided_slice %7 {offsets = [0, 0], sizes = [1, 128], strides = [1, 1]} : vector<16x128xf32> to vector<1x128xf32>
    %122 = vector.broadcast %120 : vector<8x1xf32> to vector<8x128xf32>
    %123 = vector.broadcast %121 : vector<1x128xf32> to vector<8x128xf32>
    %124 = arith.mulf %122, %123 : vector<8x128xf32>
    %125 = vector.broadcast %5 : vector<1x128xf32> to vector<8x128xf32>
    %126 = arith.addf %125, %124 : vector<8x128xf32>
    %127 = vector.extract_strided_slice %119 {offsets = [0, 1], sizes = [8, 1], strides = [1, 1]} : vector<8x128xf32> to vector<8x1xf32>
    %128 = vector.extract_strided_slice %7 {offsets = [1, 0], sizes = [1, 128], strides = [1, 1]} : vector<16x128xf32> to vector<1x128xf32>
    %129 = vector.broadcast %127 : vector<8x1xf32> to vector<8x128xf32>
    %130 = vector.broadcast %128 : vector<1x128xf32> to vector<8x128xf32>
    %131 = arith.mulf %129, %130 : vector<8x128xf32>
    %132 = arith.addf %126, %131 : vector<8x128xf32>
    %133 = vector.extract_strided_slice %119 {offsets = [0, 2], sizes = [8, 1], strides = [1, 1]} : vector<8x128xf32> to vector<8x1xf32>
    %134 = vector.extract_strided_slice %7 {offsets = [2, 0], sizes = [1, 128], strides = [1, 1]} : vector<16x128xf32> to vector<1x128xf32>
    %135 = vector.broadcast %133 : vector<8x1xf32> to vector<8x128xf32>
    %136 = vector.broadcast %134 : vector<1x128xf32> to vector<8x128xf32>
    %137 = arith.mulf %135, %136 : vector<8x128xf32>
    %138 = arith.addf %132, %137 : vector<8x128xf32>
    %139 = vector.extract_strided_slice %119 {offsets = [0, 3], sizes = [8, 1], strides = [1, 1]} : vector<8x128xf32> to vector<8x1xf32>
    %140 = vector.extract_strided_slice %7 {offsets = [3, 0], sizes = [1, 128], strides = [1, 1]} : vector<16x128xf32> to vector<1x128xf32>
    %141 = vector.broadcast %139 : vector<8x1xf32> to vector<8x128xf32>
    %142 = vector.broadcast %140 : vector<1x128xf32> to vector<8x128xf32>
    %143 = arith.mulf %141, %142 : vector<8x128xf32>
    %144 = arith.addf %138, %143 : vector<8x128xf32>
    %145 = vector.extract_strided_slice %119 {offsets = [0, 4], sizes = [8, 1], strides = [1, 1]} : vector<8x128xf32> to vector<8x1xf32>
    %146 = vector.extract_strided_slice %7 {offsets = [4, 0], sizes = [1, 128], strides = [1, 1]} : vector<16x128xf32> to vector<1x128xf32>
    %147 = vector.broadcast %145 : vector<8x1xf32> to vector<8x128xf32>
    %148 = vector.broadcast %146 : vector<1x128xf32> to vector<8x128xf32>
    %149 = arith.mulf %147, %148 : vector<8x128xf32>
    %150 = arith.addf %144, %149 : vector<8x128xf32>
    %151 = vector.extract_strided_slice %119 {offsets = [0, 5], sizes = [8, 1], strides = [1, 1]} : vector<8x128xf32> to vector<8x1xf32>
    %152 = vector.extract_strided_slice %7 {offsets = [5, 0], sizes = [1, 128], strides = [1, 1]} : vector<16x128xf32> to vector<1x128xf32>
    %153 = vector.broadcast %151 : vector<8x1xf32> to vector<8x128xf32>
    %154 = vector.broadcast %152 : vector<1x128xf32> to vector<8x128xf32>
    %155 = arith.mulf %153, %154 : vector<8x128xf32>
    %156 = arith.addf %150, %155 : vector<8x128xf32>
    %157 = vector.extract_strided_slice %119 {offsets = [0, 6], sizes = [8, 1], strides = [1, 1]} : vector<8x128xf32> to vector<8x1xf32>
    %158 = vector.extract_strided_slice %7 {offsets = [6, 0], sizes = [1, 128], strides = [1, 1]} : vector<16x128xf32> to vector<1x128xf32>
    %159 = vector.broadcast %157 : vector<8x1xf32> to vector<8x128xf32>
    %160 = vector.broadcast %158 : vector<1x128xf32> to vector<8x128xf32>
    %161 = arith.mulf %159, %160 : vector<8x128xf32>
    %162 = arith.addf %156, %161 : vector<8x128xf32>
    %163 = vector.extract_strided_slice %119 {offsets = [0, 7], sizes = [8, 1], strides = [1, 1]} : vector<8x128xf32> to vector<8x1xf32>
    %164 = vector.extract_strided_slice %7 {offsets = [7, 0], sizes = [1, 128], strides = [1, 1]} : vector<16x128xf32> to vector<1x128xf32>
    %165 = vector.broadcast %163 : vector<8x1xf32> to vector<8x128xf32>
    %166 = vector.broadcast %164 : vector<1x128xf32> to vector<8x128xf32>
    %167 = arith.mulf %165, %166 : vector<8x128xf32>
    %168 = arith.addf %162, %167 : vector<8x128xf32>
    %169 = vector.extract_strided_slice %119 {offsets = [0, 8], sizes = [8, 1], strides = [1, 1]} : vector<8x128xf32> to vector<8x1xf32>
    %170 = vector.extract_strided_slice %7 {offsets = [8, 0], sizes = [1, 128], strides = [1, 1]} : vector<16x128xf32> to vector<1x128xf32>
    %171 = vector.broadcast %169 : vector<8x1xf32> to vector<8x128xf32>
    %172 = vector.broadcast %170 : vector<1x128xf32> to vector<8x128xf32>
    %173 = arith.mulf %171, %172 : vector<8x128xf32>
    %174 = arith.addf %168, %173 : vector<8x128xf32>
    %175 = vector.extract_strided_slice %119 {offsets = [0, 9], sizes = [8, 1], strides = [1, 1]} : vector<8x128xf32> to vector<8x1xf32>
    %176 = vector.extract_strided_slice %7 {offsets = [9, 0], sizes = [1, 128], strides = [1, 1]} : vector<16x128xf32> to vector<1x128xf32>
    %177 = vector.broadcast %175 : vector<8x1xf32> to vector<8x128xf32>
    %178 = vector.broadcast %176 : vector<1x128xf32> to vector<8x128xf32>
    %179 = arith.mulf %177, %178 : vector<8x128xf32>
    %180 = arith.addf %174, %179 : vector<8x128xf32>
    %181 = vector.extract_strided_slice %119 {offsets = [0, 10], sizes = [8, 1], strides = [1, 1]} : vector<8x128xf32> to vector<8x1xf32>
    %182 = vector.extract_strided_slice %7 {offsets = [10, 0], sizes = [1, 128], strides = [1, 1]} : vector<16x128xf32> to vector<1x128xf32>
    %183 = vector.broadcast %181 : vector<8x1xf32> to vector<8x128xf32>
    %184 = vector.broadcast %182 : vector<1x128xf32> to vector<8x128xf32>
    %185 = arith.mulf %183, %184 : vector<8x128xf32>
    %186 = arith.addf %180, %185 : vector<8x128xf32>
    %187 = vector.extract_strided_slice %119 {offsets = [0, 11], sizes = [8, 1], strides = [1, 1]} : vector<8x128xf32> to vector<8x1xf32>
    %188 = vector.extract_strided_slice %7 {offsets = [11, 0], sizes = [1, 128], strides = [1, 1]} : vector<16x128xf32> to vector<1x128xf32>
    %189 = vector.broadcast %187 : vector<8x1xf32> to vector<8x128xf32>
    %190 = vector.broadcast %188 : vector<1x128xf32> to vector<8x128xf32>
    %191 = arith.mulf %189, %190 : vector<8x128xf32>
    %192 = arith.addf %186, %191 : vector<8x128xf32>
    %193 = vector.extract_strided_slice %119 {offsets = [0, 12], sizes = [8, 1], strides = [1, 1]} : vector<8x128xf32> to vector<8x1xf32>
    %194 = vector.extract_strided_slice %7 {offsets = [12, 0], sizes = [1, 128], strides = [1, 1]} : vector<16x128xf32> to vector<1x128xf32>
    %195 = vector.broadcast %193 : vector<8x1xf32> to vector<8x128xf32>
    %196 = vector.broadcast %194 : vector<1x128xf32> to vector<8x128xf32>
    %197 = arith.mulf %195, %196 : vector<8x128xf32>
    %198 = arith.addf %192, %197 : vector<8x128xf32>
    %199 = vector.extract_strided_slice %119 {offsets = [0, 13], sizes = [8, 1], strides = [1, 1]} : vector<8x128xf32> to vector<8x1xf32>
    %200 = vector.extract_strided_slice %7 {offsets = [13, 0], sizes = [1, 128], strides = [1, 1]} : vector<16x128xf32> to vector<1x128xf32>
    %201 = vector.broadcast %199 : vector<8x1xf32> to vector<8x128xf32>
    %202 = vector.broadcast %200 : vector<1x128xf32> to vector<8x128xf32>
    %203 = arith.mulf %201, %202 : vector<8x128xf32>
    %204 = arith.addf %198, %203 : vector<8x128xf32>
    %205 = vector.extract_strided_slice %119 {offsets = [0, 14], sizes = [8, 1], strides = [1, 1]} : vector<8x128xf32> to vector<8x1xf32>
    %206 = vector.extract_strided_slice %7 {offsets = [14, 0], sizes = [1, 128], strides = [1, 1]} : vector<16x128xf32> to vector<1x128xf32>
    %207 = vector.broadcast %205 : vector<8x1xf32> to vector<8x128xf32>
    %208 = vector.broadcast %206 : vector<1x128xf32> to vector<8x128xf32>
    %209 = arith.mulf %207, %208 : vector<8x128xf32>
    %210 = arith.addf %204, %209 : vector<8x128xf32>
    %211 = vector.extract_strided_slice %119 {offsets = [0, 15], sizes = [8, 1], strides = [1, 1]} : vector<8x128xf32> to vector<8x1xf32>
    %212 = vector.extract_strided_slice %7 {offsets = [15, 0], sizes = [1, 128], strides = [1, 1]} : vector<16x128xf32> to vector<1x128xf32>
    %213 = vector.broadcast %211 : vector<8x1xf32> to vector<8x128xf32>
    %214 = vector.broadcast %212 : vector<1x128xf32> to vector<8x128xf32>
    %215 = arith.mulf %213, %214 : vector<8x128xf32>
    %216 = arith.addf %210, %215 : vector<8x128xf32>
    %c0_10 = arith.constant 0 : index
    %c0_11 = arith.constant 0 : index
    %217 = vector.load %arg3[%c0_10, %c0_11] : memref<8x128xf32, #tpu.memory_space<vmem>>, vector<8x128xf32>
    tpu.vector_store %arg3[%c0_10, %c0_11], %216 {strides = array<i32>} : memref<8x128xf32, #tpu.memory_space<vmem>>, vector<8x128xf32>,
    return
  }
  func.func @transform_0(%arg0: i32) -> (i32, i32) {
    %c0_i32 = arith.constant 0 : i32
    %c0_i32_0 = arith.constant 0 : i32
    return %arg0, %c0_i32 : i32, i32
  }
  func.func @transform_1(%arg0: i32) -> (i32, i32) {
    %c0_i32 = arith.constant 0 : i32
    %c0_i32_0 = arith.constant 0 : i32
    %c0_i32_1 = arith.constant 0 : i32
    return %c0_i32, %c0_i32_0 : i32, i32
  }
  func.func @transform_2(%arg0: i32) -> (i32, i32) {
    %c0_i32 = arith.constant 0 : i32
    %c0_i32_0 = arith.constant 0 : i32
    return %arg0, %c0_i32 : i32, i32
  }
}

</mosaic_0001>

<llo_original>
// kernel: dqn_forward.1
$region0: #{dqn_forward.1}
  #allocation0 [shape = 'u32[]', space=smem, size = 0x4, offset = 0x4, fixed_abs, tag = 'smem constant byte address 0x4 - core index']
  #allocation1 [shape = 'u32[144,128]{1,0:T(1,128)}', space=vmem, size = 0x12000, scoped, tag = 'internal scratch']
  %s0 = inlined_call_operand.vmem [shape: f32[8,2], index: 0, kind: input, shape index: {}]
  %s1 = inlined_call_operand.hbm [shape: f32[40,128], index: 1, kind: input, shape index: {}]
  %s2 = inlined_call_operand.vmem [shape: f32[8,128], index: 2, kind: output, shape index: {}]
  %s3 = sld [smem:[#allocation0]]
  $region22: #{dqn_forward.1} parent=0
    _
  %s5 = ssub.s32 1, %s3
  %s6 = scalar_select 0, %s5, %s3
  $region1: #{dqn_forward.1} parent=0
    #allocation2 [shape = 'u8[20480]{0}', space=vmem, size = 0x5000, scoped, tag = 'input window, operand 1, single buffered']
    #allocation3 [shape = 's32[1]{0}', space=sflag, size = 0x4, scoped, tag = 'scoped memory for dqn_forward.1']
    %7 = vsyncpa [#allocation3], 0
    // Predicated region
    $region2: #{dqn_forward.1} parent=1 // pred_check
      _
    $region3: #{dqn_forward.1} parent=1 // pred_check_branch
      %9 = sbr.rel (0) target = $region5
    $region4: #{dqn_forward.1} parent=1 // pred_region
      _
    $region5: #{dqn_forward.1} parent=1 // pred_fallthru
      _
    // Predicated region
    $region6: #{dqn_forward.1} parent=1 // pred_check
      _
    $region7: #{dqn_forward.1} parent=1 // pred_check_branch
      %11 = sbr.rel (0) target = $region9
    $region8: #{dqn_forward.1} parent=1 // pred_region
      %s13 = ssub.s32 640, 640
      %14 = vsyncadd [#allocation3], %s13
      %s15 = sshll.u32 [#allocation2], 4
      %s16 = int_to_ptr.vmem [resolvable:$true] %s15
      %21 = dma.hbm_to_vmem [thread:$0]  %s1, 640, %s16, [#allocation3], 128, 128, 8
    $region9: #{dqn_forward.1} parent=1 // pred_fallthru
      _
    // Predicated region
    $region10: #{dqn_forward.1} parent=1 // pred_check
      _
    $region11: #{dqn_forward.1} parent=1 // pred_check_branch
      %23 = sbr.rel (0) target = $region13
    $region12: #{dqn_forward.1} parent=1 // pred_region
      %24 = dma.done [#allocation3], 640
    $region13: #{dqn_forward.1} parent=1 // pred_fallthru
      _
    %v25 = vld [vmem:[%s0] sm:$0xff]
    %v26 = vld [vmem:[#allocation2] sm:$0x1]
    %v27 = vld [vmem:[#allocation2 + $0x1] sm:$0x1]
    %v28 = vld [vmem:[#allocation2 + $0x2] sm:$0x1]
    %v29 = vld [vmem:[#allocation2 + $0x3] sm:$0x1]
    %v30 = vld [vmem:[#allocation2 + $0x4] sm:$0x1]
    %v31 = vld [vmem:[#allocation2 + $0x8] sm:$0xff]
    %v32 = vld [vmem:[#allocation2 + $0x10] sm:$0xff]
    %v33 = vld [vmem:[#allocation2 + $0x18] sm:$0xff]
    %v34 = vld [vmem:[#allocation2 + $0x20] sm:$0xff]
    %36 = vset.pattern.permute.xlu0 0
    %37 = vperm.xlu0 %36, %v25
    %v38 = vpop.permute.xlu0 %37
    %v40 = vlaneseq
    %v41 = vshrl.u32 %v40, 7
    %v42 = vsub.s32 0, %v41
    %v43 = vrot.slane %v26, %v42
    %v44 = vmul.f32 %v38, %v43
    %45 = vset.pattern.permute.xlu0 1
    %46 = vperm.xlu0 %45, %v25
    %v47 = vpop.permute.xlu0 %46
    %v49 = vlaneseq
    %v50 = vshrl.u32 %v49, 7
    %v51 = vsub.s32 0, %v50
    %v52 = vrot.slane %v27, %v51
    %v53 = vmul.f32 %v47, %v52
    %v54 = vadd.f32 %v44, %v53
    %v55 = vlaneseq
    %v56 = vshrl.u32 %v55, 7
    %v57 = vsub.s32 0, %v56
    %v58 = vrot.slane %v28, %v57
    %v59 = vadd.f32 %v54, %v58
    %v60 = vmax.f32 %v59, 0.0
    %62 = vset.pattern.permute.xlu0 0
    %63 = vperm.xlu0 %62, %v60
    %v64 = vpop.permute.xlu0 %63
    %v66 = vlaneseq
    %v67 = vshrl.u32 %v66, 7
    %v68 = vsub.s32 0, %v67
    %v69 = vrot.slane %v31, %v68
    %v70 = vmul.f32 %v64, %v69
    %v71 = vlaneseq
    %v72 = vshrl.u32 %v71, 7
    %v73 = vsub.s32 0, %v72
    %v74 = vrot.slane %v29, %v73
    %v75 = vadd.f32 %v74, %v70
    %76 = vset.pattern.permute.xlu0 1
    %77 = vperm.xlu0 %76, %v60
    %v78 = vpop.permute.xlu0 %77
    %v80 = vlaneseq
    %v81 = vshrl.u32 %v80, 7
    %v82 = vsub.s32 1, %v81
    %v83 = vrot.slane %v31, %v82
    %v84 = vmul.f32 %v78, %v83
    %v85 = vadd.f32 %v75, %v84
    %86 = vset.pattern.permute.xlu0 2
    %87 = vperm.xlu0 %86, %v60
    %v88 = vpop.permute.xlu0 %87
    %v90 = vlaneseq
    %v91 = vshrl.u32 %v90, 7
    %v92 = vsub.s32 2, %v91
    %v93 = vrot.slane %v31, %v92
    %v94 = vmul.f32 %v88, %v93
    %v95 = vadd.f32 %v85, %v94
    %96 = vset.pattern.permute.xlu0 3
    %97 = vperm.xlu0 %96, %v60
    %v98 = vpop.permute.xlu0 %97
    %v100 = vlaneseq
    %v101 = vshrl.u32 %v100, 7
    %v102 = vsub.s32 3, %v101
    %v103 = vrot.slane %v31, %v102
    %v104 = vmul.f32 %v98, %v103
    %v105 = vadd.f32 %v95, %v104
    %106 = vset.pattern.permute.xlu0 4
    %107 = vperm.xlu0 %106, %v60
    %v108 = vpop.permute.xlu0 %107
    %v110 = vlaneseq
    %v111 = vshrl.u32 %v110, 7
    %v112 = vsub.s32 4, %v111
    %v113 = vrot.slane %v31, %v112
    %v114 = vmul.f32 %v108, %v113
    %v115 = vadd.f32 %v105, %v114
    %116 = vset.pattern.permute.xlu0 5
    %117 = vperm.xlu0 %116, %v60
    %v118 = vpop.permute.xlu0 %117
    %v120 = vlaneseq
    %v121 = vshrl.u32 %v120, 7
    %v122 = vsub.s32 5, %v121
    %v123 = vrot.slane %v31, %v122
    %v124 = vmul.f32 %v118, %v123
    %v125 = vadd.f32 %v115, %v124
    %126 = vset.pattern.permute.xlu0 6
    %127 = vperm.xlu0 %126, %v60
    %v128 = vpop.permute.xlu0 %127
    %v130 = vlaneseq
    %v131 = vshrl.u32 %v130, 7
    %v132 = vsub.s32 6, %v131
    %v133 = vrot.slane %v31, %v132
    %v134 = vmul.f32 %v128, %v133
    %v135 = vadd.f32 %v125, %v134
    %136 = vset.pattern.permute.xlu0 7
    %137 = vperm.xlu0 %136, %v60
    %v138 = vpop.permute.xlu0 %137
    %v140 = vlaneseq
    %v141 = vshrl.u32 %v140, 7
    %v142 = vsub.s32 7, %v141
    %v143 = vrot.slane %v31, %v142
    %v144 = vmul.f32 %v138, %v143
    %v145 = vadd.f32 %v135, %v144
    %146 = vset.pattern.permute.xlu0 8
    %147 = vperm.xlu0 %146, %v60
    %v148 = vpop.permute.xlu0 %147
    %v150 = vlaneseq
    %v151 = vshrl.u32 %v150, 7
    %v152 = vsub.s32 0, %v151
    %v153 = vrot.slane %v32, %v152
    %v154 = vmul.f32 %v148, %v153
    %v155 = vadd.f32 %v145, %v154
    %156 = vset.pattern.permute.xlu0 9
    %157 = vperm.xlu0 %156, %v60
    %v158 = vpop.permute.xlu0 %157
    %v160 = vlaneseq
    %v161 = vshrl.u32 %v160, 7
    %v162 = vsub.s32 1, %v161
    %v163 = vrot.slane %v32, %v162
    %v164 = vmul.f32 %v158, %v163
    %v165 = vadd.f32 %v155, %v164
    %166 = vset.pattern.permute.xlu0 10
    %167 = vperm.xlu0 %166, %v60
    %v168 = vpop.permute.xlu0 %167
    %v170 = vlaneseq
    %v171 = vshrl.u32 %v170, 7
    %v172 = vsub.s32 2, %v171
    %v173 = vrot.slane %v32, %v172
    %v174 = vmul.f32 %v168, %v173
    %v175 = vadd.f32 %v165, %v174
    %176 = vset.pattern.permute.xlu0 11
    %177 = vperm.xlu0 %176, %v60
    %v178 = vpop.permute.xlu0 %177
    %v180 = vlaneseq
    %v181 = vshrl.u32 %v180, 7
    %v182 = vsub.s32 3, %v181
    %v183 = vrot.slane %v32, %v182
    %v184 = vmul.f32 %v178, %v183
    %v185 = vadd.f32 %v175, %v184
    %186 = vset.pattern.permute.xlu0 12
    %187 = vperm.xlu0 %186, %v60
    %v188 = vpop.permute.xlu0 %187
    %v190 = vlaneseq
    %v191 = vshrl.u32 %v190, 7
    %v192 = vsub.s32 4, %v191
    %v193 = vrot.slane %v32, %v192
    %v194 = vmul.f32 %v188, %v193
    %v195 = vadd.f32 %v185, %v194
    %196 = vset.pattern.permute.xlu0 13
    %197 = vperm.xlu0 %196, %v60
    %v198 = vpop.permute.xlu0 %197
    %v200 = vlaneseq
    %v201 = vshrl.u32 %v200, 7
    %v202 = vsub.s32 5, %v201
    %v203 = vrot.slane %v32, %v202
    %v204 = vmul.f32 %v198, %v203
    %v205 = vadd.f32 %v195, %v204
    %206 = vset.pattern.permute.xlu0 14
    %207 = vperm.xlu0 %206, %v60
    %v208 = vpop.permute.xlu0 %207
    %v210 = vlaneseq
    %v211 = vshrl.u32 %v210, 7
    %v212 = vsub.s32 6, %v211
    %v213 = vrot.slane %v32, %v212
    %v214 = vmul.f32 %v208, %v213
    %v215 = vadd.f32 %v205, %v214
    %216 = vset.pattern.permute.xlu0 15
    %217 = vperm.xlu0 %216, %v60
    %v218 = vpop.permute.xlu0 %217
    %v220 = vlaneseq
    %v221 = vshrl.u32 %v220, 7
    %v222 = vsub.s32 7, %v221
    %v223 = vrot.slane %v32, %v222
    %v224 = vmul.f32 %v218, %v223
    %v225 = vadd.f32 %v215, %v224
    %v226 = vmax.f32 %v225, 0.0
    %228 = vset.pattern.permute.xlu0 0
    %229 = vperm.xlu0 %228, %v226
    %v230 = vpop.permute.xlu0 %229
    %v232 = vlaneseq
    %v233 = vshrl.u32 %v232, 7
    %v234 = vsub.s32 0, %v233
    %v235 = vrot.slane %v33, %v234
    %v236 = vmul.f32 %v230, %v235
    %v237 = vlaneseq
    %v238 = vshrl.u32 %v237, 7
    %v239 = vsub.s32 0, %v238
    %v240 = vrot.slane %v30, %v239
    %v241 = vadd.f32 %v240, %v236
    %242 = vset.pattern.permute.xlu0 1
    %243 = vperm.xlu0 %242, %v226
    %v244 = vpop.permute.xlu0 %243
    %v246 = vlaneseq
    %v247 = vshrl.u32 %v246, 7
    %v248 = vsub.s32 1, %v247
    %v249 = vrot.slane %v33, %v248
    %v250 = vmul.f32 %v244, %v249
    %v251 = vadd.f32 %v241, %v250
    %252 = vset.pattern.permute.xlu0 2
    %253 = vperm.xlu0 %252, %v226
    %v254 = vpop.permute.xlu0 %253
    %v256 = vlaneseq
    %v257 = vshrl.u32 %v256, 7
    %v258 = vsub.s32 2, %v257
    %v259 = vrot.slane %v33, %v258
    %v260 = vmul.f32 %v254, %v259
    %v261 = vadd.f32 %v251, %v260
    %262 = vset.pattern.permute.xlu0 3
    %263 = vperm.xlu0 %262, %v226
    %v264 = vpop.permute.xlu0 %263
    %v266 = vlaneseq
    %v267 = vshrl.u32 %v266, 7
    %v268 = vsub.s32 3, %v267
    %v269 = vrot.slane %v33, %v268
    %v270 = vmul.f32 %v264, %v269
    %v271 = vadd.f32 %v261, %v270
    %272 = vset.pattern.permute.xlu0 4
    %273 = vperm.xlu0 %272, %v226
    %v274 = vpop.permute.xlu0 %273
    %v276 = vlaneseq
    %v277 = vshrl.u32 %v276, 7
    %v278 = vsub.s32 4, %v277
    %v279 = vrot.slane %v33, %v278
    %v280 = vmul.f32 %v274, %v279
    %v281 = vadd.f32 %v271, %v280
    %282 = vset.pattern.permute.xlu0 5
    %283 = vperm.xlu0 %282, %v226
    %v284 = vpop.permute.xlu0 %283
    %v286 = vlaneseq
    %v287 = vshrl.u32 %v286, 7
    %v288 = vsub.s32 5, %v287
    %v289 = vrot.slane %v33, %v288
    %v290 = vmul.f32 %v284, %v289
    %v291 = vadd.f32 %v281, %v290
    %292 = vset.pattern.permute.xlu0 6
    %293 = vperm.xlu0 %292, %v226
    %v294 = vpop.permute.xlu0 %293
    %v296 = vlaneseq
    %v297 = vshrl.u32 %v296, 7
    %v298 = vsub.s32 6, %v297
    %v299 = vrot.slane %v33, %v298
    %v300 = vmul.f32 %v294, %v299
    %v301 = vadd.f32 %v291, %v300
    %302 = vset.pattern.permute.xlu0 7
    %303 = vperm.xlu0 %302, %v226
    %v304 = vpop.permute.xlu0 %303
    %v306 = vlaneseq
    %v307 = vshrl.u32 %v306, 7
    %v308 = vsub.s32 7, %v307
    %v309 = vrot.slane %v33, %v308
    %v310 = vmul.f32 %v304, %v309
    %v311 = vadd.f32 %v301, %v310
    %312 = vset.pattern.permute.xlu0 8
    %313 = vperm.xlu0 %312, %v226
    %v314 = vpop.permute.xlu0 %313
    %v316 = vlaneseq
    %v317 = vshrl.u32 %v316, 7
    %v318 = vsub.s32 0, %v317
    %v319 = vrot.slane %v34, %v318
    %v320 = vmul.f32 %v314, %v319
    %v321 = vadd.f32 %v311, %v320
    %322 = vset.pattern.permute.xlu0 9
    %323 = vperm.xlu0 %322, %v226
    %v324 = vpop.permute.xlu0 %323
    %v326 = vlaneseq
    %v327 = vshrl.u32 %v326, 7
    %v328 = vsub.s32 1, %v327
    %v329 = vrot.slane %v34, %v328
    %v330 = vmul.f32 %v324, %v329
    %v331 = vadd.f32 %v321, %v330
    %332 = vset.pattern.permute.xlu0 10
    %333 = vperm.xlu0 %332, %v226
    %v334 = vpop.permute.xlu0 %333
    %v336 = vlaneseq
    %v337 = vshrl.u32 %v336, 7
    %v338 = vsub.s32 2, %v337
    %v339 = vrot.slane %v34, %v338
    %v340 = vmul.f32 %v334, %v339
    %v341 = vadd.f32 %v331, %v340
    %342 = vset.pattern.permute.xlu0 11
    %343 = vperm.xlu0 %342, %v226
    %v344 = vpop.permute.xlu0 %343
    %v346 = vlaneseq
    %v347 = vshrl.u32 %v346, 7
    %v348 = vsub.s32 3, %v347
    %v349 = vrot.slane %v34, %v348
    %v350 = vmul.f32 %v344, %v349
    %v351 = vadd.f32 %v341, %v350
    %352 = vset.pattern.permute.xlu0 12
    %353 = vperm.xlu0 %352, %v226
    %v354 = vpop.permute.xlu0 %353
    %v356 = vlaneseq
    %v357 = vshrl.u32 %v356, 7
    %v358 = vsub.s32 4, %v357
    %v359 = vrot.slane %v34, %v358
    %v360 = vmul.f32 %v354, %v359
    %v361 = vadd.f32 %v351, %v360
    %362 = vset.pattern.permute.xlu0 13
    %363 = vperm.xlu0 %362, %v226
    %v364 = vpop.permute.xlu0 %363
    %v366 = vlaneseq
    %v367 = vshrl.u32 %v366, 7
    %v368 = vsub.s32 5, %v367
    %v369 = vrot.slane %v34, %v368
    %v370 = vmul.f32 %v364, %v369
    %v371 = vadd.f32 %v361, %v370
    %372 = vset.pattern.permute.xlu0 14
    %373 = vperm.xlu0 %372, %v226
    %v374 = vpop.permute.xlu0 %373
    %v376 = vlaneseq
    %v377 = vshrl.u32 %v376, 7
    %v378 = vsub.s32 6, %v377
    %v379 = vrot.slane %v34, %v378
    %v380 = vmul.f32 %v374, %v379
    %v381 = vadd.f32 %v371, %v380
    %382 = vset.pattern.permute.xlu0 15
    %383 = vperm.xlu0 %382, %v226
    %v384 = vpop.permute.xlu0 %383
    %v386 = vlaneseq
    %v387 = vshrl.u32 %v386, 7
    %v388 = vsub.s32 7, %v387
    %v389 = vrot.slane %v34, %v388
    %v390 = vmul.f32 %v384, %v389
    %v391 = vadd.f32 %v381, %v390
    %392 = vst [vmem:[%s2] sm:$0xff] %v391
    // Predicated region
    $region14: #{dqn_forward.1} parent=1 // pred_check
      _
    $region15: #{dqn_forward.1} parent=1 // pred_check_branch
      %394 = sbr.rel (0) target = $region17
    $region16: #{dqn_forward.1} parent=1 // pred_region
      _
    $region17: #{dqn_forward.1} parent=1 // pred_fallthru
      _
    // Predicated region
    $region18: #{dqn_forward.1} parent=1 // pred_check
      _
    $region19: #{dqn_forward.1} parent=1 // pred_check_branch
      %396 = sbr.rel (0) target = $region21
    $region20: #{dqn_forward.1} parent=1 // pred_region
      _
    $region21: #{dqn_forward.1} parent=1 // pred_fallthru
      _
    %397 = vsyncpa [#allocation3], 1

</llo_original>
